<compile_context>
chip_gen: v7x
topology: tpu7x:2x2x1
jax: 0.10.0
libtpu: 0.0.40
codegen_flags: <defaults>
</compile_context>

<pallas_src>
import functools
import math

import jax
import jax.numpy as jnp
from jax.experimental import pallas as pl
from jax.experimental.pallas import tpu as pltpu

_LOG2 = math.log(2.0)  # Python float -> compile-time literal (no captured consts)


# ----------------------------------------------------------------------------
# helpers
# ----------------------------------------------------------------------------
def _round_up(x: int, m: int) -> int:
    return (x + m - 1) // m * m


def _pick_tile(dim_pad: int) -> int:
    """Largest of 512/256/128 that divides dim_pad (dim_pad is a 128-multiple)."""
    for t in (512, 256, 128):
        if dim_pad % t == 0:
            return min(t, dim_pad)
    return dim_pad


# ----------------------------------------------------------------------------
# Kernel 1: ShiftedSoftplus   y = softplus(x) - log(2)
# ----------------------------------------------------------------------------
def _ssp_kernel(x_ref, o_ref):
    xf = x_ref[...].astype(jnp.float32)
    # Numerically stable softplus.  For x > 20 the log1p term is < ulp(20) in f32,
    # so this already matches PyTorch's linear-region behaviour bit-for-bit; no
    # explicit threshold branch needed.
    sp = jnp.maximum(xf, 0.0) + jnp.log1p(jnp.exp(-jnp.abs(xf)))
    o_ref[...] = (sp - _LOG2).astype(o_ref.dtype)


def shifted_softplus(x):
    """Elementwise ShiftedSoftplus on a [rows, features] array (any row count)."""
    orig_shape = x.shape
    x2 = x if x.ndim == 2 else x.reshape(-1, orig_shape[-1])
    R, C = x2.shape

    sublane = 16 if x2.dtype == jnp.bfloat16 else 8
    C_pad = _round_up(C, 128)

    # Big row tiles (amortize ~0.35 us/step), capped by a conservative VMEM budget:
    # in + out, double-buffered, f32-sized.
    tile_r = min(1024, _round_up(R, sublane))
    bytes_per_row = 2 * 2 * C_pad * 4
    max_rows = max(sublane, ((24 * 1024 * 1024) // bytes_per_row) // sublane * sublane)
    tile_r = max(sublane, min(tile_r, max_rows))

    R_pad = _round_up(R, tile_r)
    if R_pad != R or C_pad != C:
        xp = jnp.zeros((R_pad, C_pad), x2.dtype).at[:R, :C].set(x2)
    else:
        xp = x2

    y = pl.pallas_call(
        _ssp_kernel,
        out_shape=jax.ShapeDtypeStruct((R_pad, C_pad), x2.dtype),
        grid=(R_pad // tile_r,),
        in_specs=[pl.BlockSpec((tile_r, C_pad), lambda i: (i, 0))],
        out_specs=pl.BlockSpec((tile_r, C_pad), lambda i: (i, 0)),
        compiler_params=pltpu.CompilerParams(dimension_semantics=("parallel",)),
    )(xp)

    y = y[:R, :C]
    return y.reshape(orig_shape)


# ----------------------------------------------------------------------------
# Kernel 2: Linear + ShiftedSoftplus fused epilogue (SchNet filter-MLP layer)
# ----------------------------------------------------------------------------
def _linear_ssp_kernel(x_ref, w_ref, b_ref, o_ref, acc_ref, *, apply_act):
    @pl.when(pl.program_id(2) == 0)
    def _init():
        acc_ref[...] = jnp.zeros_like(acc_ref)

    acc_ref[...] += jnp.dot(
        x_ref[...], w_ref[...], preferred_element_type=jnp.float32
    )

    @pl.when(pl.program_id(2) == pl.num_programs(2) - 1)
    def _finish():
        y = acc_ref[...] + b_ref[...].astype(jnp.float32)
        if apply_act:
            y = jnp.maximum(y, 0.0) + jnp.log1p(jnp.exp(-jnp.abs(y))) - _LOG2
        o_ref[...] = y.astype(o_ref.dtype)


def linear_shifted_softplus(x, w, b, *, apply_act=True):
    """y = shifted_softplus(x @ w + b), activation fused into the matmul epilogue.

    x: [M, K], w: [K, N], b: [N].  Arbitrary M handled via padding.
    """
    M, K = x.shape
    K2, N = w.shape
    assert K == K2 and b.shape == (N,)

    K_pad = _round_up(K, 128)
    N_pad = _round_up(N, 128)
    tm = min(256, _round_up(M, 8))
    M_pad = _round_up(M, tm)
    tn = _pick_tile(N_pad)
    tk = _pick_tile(K_pad)

    xp = jnp.zeros((M_pad, K_pad), x.dtype).at[:M, :K].set(x)
    wp = jnp.zeros((K_pad, N_pad), w.dtype).at[:K, :N].set(w)
    bp = jnp.zeros((1, N_pad), b.dtype).at[0, :N].set(b)

    out = pl.pallas_call(
        functools.partial(_linear_ssp_kernel, apply_act=apply_act),
        out_shape=jax.ShapeDtypeStruct((M_pad, N_pad), x.dtype),
        grid=(M_pad // tm, N_pad // tn, K_pad // tk),
        in_specs=[
            pl.BlockSpec((tm, tk), lambda i, j, k: (i, k)),
            pl.BlockSpec((tk, tn), lambda i, j, k: (k, j)),
            pl.BlockSpec((1, tn), lambda i, j, k: (0, j)),
        ],
        out_specs=pl.BlockSpec((tm, tn), lambda i, j, k: (i, j)),
        scratch_shapes=[pltpu.VMEM((tm, tn), jnp.float32)],
        compiler_params=pltpu.CompilerParams(
            dimension_semantics=("parallel", "parallel", "arbitrary")
        ),
    )(xp, wp, bp)

    return out[:M, :N]


# ----------------------------------------------------------------------------
# demo / correctness check
# ----------------------------------------------------------------------------
if __name__ == "__main__":
    key = jax.random.PRNGKey(0)
    k1, k2, k3, k4 = jax.random.split(key, 4)

    # Small shapes consistent with the module: num_nodes=16, num_edges=40,
    # hidden_dim=128 (node features and edge filter-MLP).
    num_nodes, num_edges, hidden = 16, 40, 128
    node_feat = jax.random.normal(k1, (num_nodes, hidden), dtype=jnp.float32) * 3.0
    edge_attr = jax.random.normal(k2, (num_edges, hidden), dtype=jnp.float32)
    w = jax.random.normal(k3, (hidden, hidden), dtype=jnp.float32) / math.sqrt(hidden)
    b = jax.random.normal(k4, (hidden,), dtype=jnp.float32) * 0.1

    y_act = shifted_softplus(node_feat)
    y_lin = linear_shifted_softplus(edge_attr, w, b)
    jax.block_until_ready((y_act, y_lin))

    def ssp_ref(v):
        return jnp.maximum(v, 0.0) + jnp.log1p(jnp.exp(-jnp.abs(v))) - _LOG2

    ref_act = ssp_ref(node_feat)
    ref_lin = ssp_ref(edge_attr @ w + b)

    assert jnp.allclose(y_act, ref_act, atol=1e-5, rtol=1e-5), "ssp mismatch"
    assert jnp.allclose(y_lin, ref_lin, atol=1e-4, rtol=1e-4), "linear+ssp mismatch"

    print("KERNEL_OK")
</pallas_src>

<mosaic_0001>
module attributes {stable_mosaic.version = 11 : i64} {
  func.func @_ssp_kernel(%arg0: i32, %arg1: memref<16x128xf32, #tpu.memory_space<vmem>>, %arg2: memref<16x128xf32, #tpu.memory_space<vmem>>) attributes {dimension_semantics = [#tpu.dimension_semantics<parallel>], iteration_bounds = array<i64: 1>, scalar_prefetch = 0 : i64, scratch_operands = 0 : i64, tpu.core_type = #tpu.core_type<tc>, window_params = [{transform_indices = @transform_0, window_bounds = array<i64: 16, 128>}, {transform_indices = @transform_1, window_bounds = array<i64: 16, 128>}]} {
    %c0 = arith.constant 0 : index
    %c0_0 = arith.constant 0 : index
    %0 = vector.load %arg1[%c0, %c0_0] : memref<16x128xf32, #tpu.memory_space<vmem>>, vector<16x128xf32>
    %cst = arith.constant 0.000000e+00 : f32
    %1 = vector.broadcast %cst : f32 to vector<16x128xf32>
    %2 = arith.maximumf %0, %1 : vector<16x128xf32>
    %3 = math.absf %0 : vector<16x128xf32>
    %cst_1 = arith.constant 0.000000e+00 : f32
    %4 = vector.broadcast %cst_1 : f32 to vector<16x128xf32>
    %5 = arith.subf %4, %3 : vector<16x128xf32>
    %6 = math.exp %5 : vector<16x128xf32>
    %7 = math.log1p %6 : vector<16x128xf32>
    %8 = arith.addf %2, %7 : vector<16x128xf32>
    %cst_2 = arith.constant 0.693147182 : f32
    %9 = vector.broadcast %cst_2 : f32 to vector<16x128xf32>
    %10 = arith.subf %8, %9 : vector<16x128xf32>
    %c0_3 = arith.constant 0 : index
    %c0_4 = arith.constant 0 : index
    %11 = vector.load %arg2[%c0_3, %c0_4] : memref<16x128xf32, #tpu.memory_space<vmem>>, vector<16x128xf32>
    tpu.vector_store %arg2[%c0_3, %c0_4], %10 {strides = array<i32>} : memref<16x128xf32, #tpu.memory_space<vmem>>, vector<16x128xf32>,
    return
  }
  func.func @transform_0(%arg0: i32) -> (i32, i32) {
    %c0_i32 = arith.constant 0 : i32
    %c0_i32_0 = arith.constant 0 : i32
    return %arg0, %c0_i32 : i32, i32
  }
  func.func @transform_1(%arg0: i32) -> (i32, i32) {
    %c0_i32 = arith.constant 0 : i32
    %c0_i32_0 = arith.constant 0 : i32
    return %arg0, %c0_i32 : i32, i32
  }
}

</mosaic_0001>

<llo_original>
// kernel: tpu_custom_call.1
$region0: #{tpu_custom_call.1}
  #allocation0 [shape = 'u32[]', space=smem, size = 0x4, offset = 0x4, fixed_abs, tag = 'smem constant byte address 0x4 - core index']
  #allocation1 [shape = 'u32[144,128]{1,0:T(1,128)}', space=vmem, size = 0x12000, scoped, tag = 'internal scratch']
  %s0 = inlined_call_operand.hbm [shape: f32[16,128], index: 0, kind: input, shape index: {}]
  %s1 = inlined_call_operand.hbm [shape: f32[16,128], index: 1, kind: output, shape index: {}]
  %s2 = sld [smem:[#allocation0]]
  $region18: #{tpu_custom_call.1} parent=0
    _
  %s4 = ssub.s32 1, %s2
  %s5 = scalar_select 0, %s4, %s2
  $region1: #{tpu_custom_call.1} parent=0
    #allocation2 [shape = 'u8[8192]{0}', space=vmem, size = 0x2000, scoped, tag = 'input window, operand 0, single buffered']
    #allocation3 [shape = 's32[1]{0}', space=sflag, size = 0x4, scoped, tag = 'scoped memory for tpu_custom_call.1']
    #allocation4 [shape = 's32[1]{0}', space=sflag, size = 0x4, scoped, tag = 'scoped memory for tpu_custom_call.1']
    #allocation5 [shape = 'u8[8192]{0}', space=vmem, size = 0x2000, scoped, tag = 'output window, operand 0, single buffered']
    %6 = vsyncpa [#allocation3], 0
    %7 = vsyncpa [#allocation4], 0
    // Predicated region
    $region2: #{tpu_custom_call.1} parent=1 // pred_check
      _
    $region3: #{tpu_custom_call.1} parent=1 // pred_check_branch
      %9 = sbr.rel (0) target = $region5
    $region4: #{tpu_custom_call.1} parent=1 // pred_region
      %s11 = ssub.s32 256, 256
      %12 = vsyncadd [#allocation3], %s11
      %s13 = sshll.u32 [#allocation2], 4
      %s14 = int_to_ptr.vmem [resolvable:$true] %s13
      %19 = dma.hbm_to_vmem [thread:$0]  %s0, 256, %s14, [#allocation3], 128, 128, 8
    $region5: #{tpu_custom_call.1} parent=1 // pred_fallthru
      _
    // Predicated region
    $region6: #{tpu_custom_call.1} parent=1 // pred_check
      _
    $region7: #{tpu_custom_call.1} parent=1 // pred_check_branch
      %21 = sbr.rel (0) target = $region9
    $region8: #{tpu_custom_call.1} parent=1 // pred_region
      %22 = dma.done [#allocation3], 256
    $region9: #{tpu_custom_call.1} parent=1 // pred_fallthru
      _
    %v23 = vld [vmem:[#allocation2] sm:$0xff]
    %v24 = vld [vmem:[#allocation2 + $0x8] sm:$0xff]
    %v25 = vmax.f32 %v23, 0.0
    %v26 = vmax.f32 %v24, 0.0
    %v27 = vand.u32 2147483647, %v23
    %v28 = vand.u32 2147483647, %v24
    %v29 = vsub.f32 0.0, %v27
    %v30 = vsub.f32 0.0, %v28
    %v31 = vmul.f32 %v29, 1.442695
    %v32 = vpow.pop %v31
    %v33 = vmul.f32 %v30, 1.442695
    %v34 = vpow.pop %v33
    %v35 = vadd.f32 %v32, 1.0
    %v36 = vlog2.pop %v35
    %v37 = vmul.f32 %v36, 0.6931472
    %v38 = vmul.f32 -0.5, %v32
    %v39 = vadd.f32 %v38, 1.0
    %v40 = vmul.f32 %v39, %v32
    %v41 = vand.u32 2147483647, %v32
    %vm42 = vcmp.lt.f32.partialorder %v41, 0.0004427343
    %v43 = vsel %vm42, %v40, %v37
    %v44 = vadd.f32 %v34, 1.0
    %v45 = vlog2.pop %v44
    %v46 = vmul.f32 %v45, 0.6931472
    %v47 = vmul.f32 -0.5, %v34
    %v48 = vadd.f32 %v47, 1.0
    %v49 = vmul.f32 %v48, %v34
    %v50 = vand.u32 2147483647, %v34
    %vm51 = vcmp.lt.f32.partialorder %v50, 0.0004427343
    %v52 = vsel %vm51, %v49, %v46
    %v53 = vadd.f32 %v25, %v43
    %v54 = vadd.f32 %v26, %v52
    %v55 = vsub.f32 %v53, 0.6931472
    %v56 = vsub.f32 %v54, 0.6931472
    %57 = vst [vmem:[#allocation5] sm:$0xff] %v55
    %58 = vst [vmem:[#allocation5 + $0x8] sm:$0xff] %v56
    // Predicated region
    $region10: #{tpu_custom_call.1} parent=1 // pred_check
      _
    $region11: #{tpu_custom_call.1} parent=1 // pred_check_branch
      %60 = sbr.rel (0) target = $region13
    $region12: #{tpu_custom_call.1} parent=1 // pred_region
      %s62 = ssub.s32 256, 256
      %63 = vsyncadd [#allocation4], %s62
      %s64 = sshll.u32 [#allocation5], 4
      %s65 = int_to_ptr.vmem [resolvable:$true] %s64
      %70 = dma.vmem_to_hbm [thread:$0]  %s65, 256, %s1, [#allocation4], 128, 128, 8
    $region13: #{tpu_custom_call.1} parent=1 // pred_fallthru
      _
    // Predicated region
    $region14: #{tpu_custom_call.1} parent=1 // pred_check
      _
    $region15: #{tpu_custom_call.1} parent=1 // pred_check_branch
      %72 = sbr.rel (0) target = $region17
    $region16: #{tpu_custom_call.1} parent=1 // pred_region
      %73 = dma.done [#allocation4], 256
    $region17: #{tpu_custom_call.1} parent=1 // pred_fallthru
      _
    %74 = vsyncpa [#allocation3], 1
    %75 = vsyncpa [#allocation4], 1

</llo_original>
